<compile_context>
chip_gen: v5e
topology: v5e:2x2
jax: 0.10.0
libtpu: 0.0.40
codegen_flags: <defaults>
</compile_context>

<pallas_src>
import jax
import jax.numpy as jnp
from jax import lax
from jax.experimental import pallas as pl
from jax.experimental.pallas import tpu as pltpu


# ----------------------------- fused decode kernel ---------------------------

def _make_decode_kernel(n_layers, hid_dim, vocab, vocab_pad, batch):
    H = hid_dim

    def kernel(*refs):
        it = iter(refs)
        init_ids_ref = next(it)                      # [B, 1] int32
        h0_ref = next(it)                            # [L, B, H] f32
        c0_ref = next(it)                            # [L, B, H] f32
        emb_ref = next(it)                           # [V, E]    bf16 (VMEM-resident)
        w_refs = [next(it) for _ in range(n_layers)] # [in_l+H, 4H] bf16
        b_refs = [next(it) for _ in range(n_layers)] # [1, 4H]   f32 (b_ih + b_hh)
        fc_w_ref = next(it)                          # [H, Vp]   bf16
        fc_b_ref = next(it)                          # [1, Vp]   f32 (pads = -1e9)
        pred_ref = next(it)                          # [1, B, Vp] block of [T, B, Vp]
        h_ref = next(it)                             # [L, B, H] output == state
        c_ref = next(it)                             # [L, B, H] output == state
        ids_scr = next(it)                           # [B, 1] int32 VMEM scratch

        t = pl.program_id(0)

        @pl.when(t == 0)
        def _init():
            ids_scr[...] = init_ids_ref[...]
            h_ref[...] = h0_ref[...]
            c_ref[...] = c0_ref[...]

        # -------- embedding lookup: one-hot @ table (table stays in VMEM) --------
        ids = ids_scr[...]                                            # [B, 1]
        lane_v = lax.broadcasted_iota(jnp.int32, (batch, vocab), 1)   # [B, V]
        onehot = jnp.where(ids == lane_v, 1.0, 0.0).astype(jnp.bfloat16)
        x = jnp.dot(onehot, emb_ref[...],
                    preferred_element_type=jnp.float32)               # [B, E] f32
        # dropout(embedded) is identity in eval mode.

        # -------- n_layers fused LSTM cells: one K=(in+H) matmul per layer --------
        for layer in range(n_layers):
            h_l = h_ref[layer]                                        # [B, H]
            c_l = c_ref[layer]
            xh = jnp.concatenate([x, h_l], axis=-1).astype(jnp.bfloat16)
            gates = (jnp.dot(xh, w_refs[layer][...],
                             preferred_element_type=jnp.float32)
                     + b_refs[layer][...])                            # [B, 4H] f32
            # Full-tile activations (lane-dense EUP), then static band slices.
            sg = jax.nn.sigmoid(gates)
            th = jnp.tanh(gates)
            i_g = sg[:, 0 * H:1 * H]
            f_g = sg[:, 1 * H:2 * H]
            g_g = th[:, 2 * H:3 * H]
            o_g = sg[:, 3 * H:4 * H]
            c_new = f_g * c_l + i_g * g_g
            h_new = o_g * jnp.tanh(c_new)
            h_ref[layer] = h_new
            c_ref[layer] = c_new
            x = h_new      # inter-layer dropout is identity in eval mode

        # -------- fc_out (vocab padded to a lane-dense multiple of 128) --------
        logits = (jnp.dot(x.astype(jnp.bfloat16), fc_w_ref[...],
                          preferred_element_type=jnp.float32)
                  + fc_b_ref[...])                                    # [B, Vp]
        pred_ref[0] = logits

        # -------- greedy argmax feedback (first-max tie-break == torch.argmax) ----
        m = jnp.max(logits, axis=-1, keepdims=True)
        lane_p = lax.broadcasted_iota(jnp.int32, (batch, vocab_pad), 1)
        next_ids = jnp.min(jnp.where(logits == m, lane_p, vocab_pad),
                           axis=-1, keepdims=True).astype(jnp.int32)
        ids_scr[...] = next_ids

    return kernel


# ----------------------------- wrapper ---------------------------------------

def seq2seq_greedy_decode(params, init_ids, hidden, cell, n_steps):
    """Eval-mode Seq2Seq decode loop (teacher_forcing_ratio = 0).

    init_ids: [B] int32 (== trg[0]); hidden/cell: [n_layers, B, H] from the encoder.
    Returns (predictions [n_steps, B, vocab], final hidden, final cell).
    """
    L, B, H = hidden.shape
    V, E = params["embedding"].shape
    Vp = params["fc_w_t"].shape[1]

    kernel = _make_decode_kernel(L, H, V, Vp, B)

    c2 = lambda t: (0, 0)
    c3 = lambda t: (0, 0, 0)

    in_specs = [
        pl.BlockSpec((B, 1), c2),                 # initial token ids
        pl.BlockSpec((L, B, H), c3),              # h0
        pl.BlockSpec((L, B, H), c3),              # c0
        pl.BlockSpec((V, E), c2),                 # embedding table (resident)
    ]
    in_specs += [pl.BlockSpec(params["w_cat"][l].shape, c2) for l in range(L)]
    in_specs += [pl.BlockSpec(params["b"][l].shape, c2) for l in range(L)]
    in_specs += [pl.BlockSpec(params["fc_w_t"].shape, c2),
                 pl.BlockSpec(params["fc_b"].shape, c2)]

    out_specs = (
        pl.BlockSpec((1, B, Vp), lambda t: (t, 0, 0)),   # per-step logits (lane-dense)
        pl.BlockSpec((L, B, H), c3),                     # final hidden (VMEM-resident state)
        pl.BlockSpec((L, B, H), c3),                     # final cell
    )
    out_shape = (
        jax.ShapeDtypeStruct((n_steps, B, Vp), jnp.float32),
        jax.ShapeDtypeStruct((L, B, H), jnp.float32),
        jax.ShapeDtypeStruct((L, B, H), jnp.float32),
    )

    gate_flops = sum(2 * B * w.shape[0] * w.shape[1] for w in params["w_cat"])
    flops = n_steps * (2 * B * V * E + gate_flops + 2 * B * H * Vp)
    transcendentals = n_steps * B * L * (2 * 4 * H + H)
    bytes_accessed = (
        4 * B + 4 * 4 * hidden.size
        + 2 * params["embedding"].size
        + sum(2 * w.size for w in params["w_cat"])
        + sum(4 * b.size for b in params["b"])
        + 2 * params["fc_w_t"].size + 4 * params["fc_b"].size
        + 4 * n_steps * B * Vp)

    pred_pad, h_fin, c_fin = pl.pallas_call(
        kernel,
        out_shape=out_shape,
        grid_spec=pltpu.PrefetchScalarGridSpec(
            num_scalar_prefetch=0,
            grid=(n_steps,),
            in_specs=in_specs,
            out_specs=out_specs,
            scratch_shapes=[pltpu.VMEM((B, 1), jnp.int32)],
        ),
        compiler_params=pltpu.CompilerParams(
            dimension_semantics=("arbitrary",),           # sequential decode dependency
            vmem_limit_bytes=32 * 1024 * 1024),
        cost_estimate=pl.CostEstimate(flops=int(flops),
                                      transcendentals=int(transcendentals),
                                      bytes_accessed=int(bytes_accessed)),
    )(init_ids.reshape(B, 1).astype(jnp.int32), hidden, cell,
      params["embedding"], *params["w_cat"], *params["b"],
      params["fc_w_t"], params["fc_b"])

    return pred_pad[:, :, :V], h_fin, c_fin


# ----------------------------- pure-JAX reference ----------------------------

def decode_reference(params, init_ids, hidden, cell, n_steps):
    V, E = params["embedding"].shape
    L, B, H = hidden.shape
    ids = init_ids.astype(jnp.int32)
    h, c = hidden, cell
    preds = []
    for _ in range(n_steps):
        onehot = (ids[:, None] == jnp.arange(V, dtype=jnp.int32)[None, :]
                  ).astype(jnp.bfloat16)
        x = jnp.dot(onehot, params["embedding"], preferred_element_type=jnp.float32)
        new_h, new_c = [], []
        for l in range(L):
            xh = jnp.concatenate([x, h[l]], axis=-1).astype(jnp.bfloat16)
            gates = (jnp.dot(xh, params["w_cat"][l],
                             preferred_element_type=jnp.float32) + params["b"][l])
            i = jax.nn.sigmoid(gates[:, 0 * H:1 * H])
            f = jax.nn.sigmoid(gates[:, 1 * H:2 * H])
            g = jnp.tanh(gates[:, 2 * H:3 * H])
            o = jax.nn.sigmoid(gates[:, 3 * H:4 * H])
            c_new = f * c[l] + i * g
            h_new = o * jnp.tanh(c_new)
            new_h.append(h_new)
            new_c.append(c_new)
            x = h_new
        h = jnp.stack(new_h, 0)
        c = jnp.stack(new_c, 0)
        logits = (jnp.dot(x.astype(jnp.bfloat16), params["fc_w_t"],
                          preferred_element_type=jnp.float32) + params["fc_b"])
        preds.append(logits[:, :V])
        ids = jnp.argmax(logits, axis=-1).astype(jnp.int32)
    return jnp.stack(preds, 0), h, c


# ----------------------------- param init ------------------------------------

def init_params(key, output_dim, emb_dim, hid_dim, n_layers):
    vocab_pad = ((output_dim + 127) // 128) * 128

    def u(k, shape):
        return jax.random.uniform(k, shape, jnp.float32, -0.08, 0.08)

    keys = jax.random.split(key, 3 + 4 * n_layers)
    ki = iter(keys)

    embedding = u(next(ki), (output_dim, emb_dim)).astype(jnp.bfloat16)

    w_cat, b = [], []
    for layer in range(n_layers):
        in_dim = emb_dim if layer == 0 else hid_dim
        w_ih = u(next(ki), (4 * hid_dim, in_dim))      # PyTorch layout [4H, in]
        w_hh = u(next(ki), (4 * hid_dim, hid_dim))     # PyTorch layout [4H, H]
        b_ih = u(next(ki), (4 * hid_dim,))
        b_hh = u(next(ki), (4 * hid_dim,))
        # combined weight so xh = [x, h] needs a single dot
        w_cat.append(jnp.concatenate([w_ih.T, w_hh.T], axis=0).astype(jnp.bfloat16))
        b.append((b_ih + b_hh).reshape(1, 4 * hid_dim).astype(jnp.float32))

    fc_w = u(next(ki), (output_dim, hid_dim))
    fc_b = u(next(ki), (output_dim,))
    fc_w_t = jnp.zeros((hid_dim, vocab_pad), jnp.float32)
    fc_w_t = fc_w_t.at[:, :output_dim].set(fc_w.T).astype(jnp.bfloat16)
    fc_b_pad = jnp.full((1, vocab_pad), -1e9, jnp.float32)
    fc_b_pad = fc_b_pad.at[0, :output_dim].set(fc_b)

    return {"embedding": embedding, "w_cat": w_cat, "b": b,
            "fc_w_t": fc_w_t, "fc_b": fc_b_pad}


# ----------------------------- main -------------------------------------------

if __name__ == "__main__":
    output_dim = 16     # target vocab
    emb_dim = 32
    hid_dim = 32
    n_layers = 2
    batch = 8
    n_steps = 6         # == trg_len - 1 decode steps

    key = jax.random.PRNGKey(0)
    k_params, k_ids, k_h, k_c = jax.random.split(key, 4)

    params = init_params(k_params, output_dim, emb_dim, hid_dim, n_layers)
    init_ids = jax.random.randint(k_ids, (batch,), 0, output_dim, dtype=jnp.int32)
    # stand-ins for encoder-produced state (encoder not ported; see TODO above)
    hidden = 0.1 * jax.random.normal(k_h, (n_layers, batch, hid_dim), jnp.float32)
    cell = 0.1 * jax.random.normal(k_c, (n_layers, batch, hid_dim), jnp.float32)

    pred, h_fin, c_fin = seq2seq_greedy_decode(params, init_ids, hidden, cell, n_steps)
    pred = jax.block_until_ready(pred)
    h_fin = jax.block_until_ready(h_fin)
    c_fin = jax.block_until_ready(c_fin)

    ref_pred, ref_h, ref_c = decode_reference(params, init_ids, hidden, cell, n_steps)
    assert pred.shape == (n_steps, batch, output_dim)
    assert jnp.allclose(pred, ref_pred, atol=2e-3, rtol=2e-3)
    assert jnp.allclose(h_fin, ref_h, atol=2e-3, rtol=2e-3)
    assert jnp.allclose(c_fin, ref_c, atol=2e-3, rtol=2e-3)

    print("KERNEL_OK")
</pallas_src>

<mosaic_0001>
module attributes {stable_mosaic.version = 11 : i64} {
  func.func @kernel(%arg0: i32, %arg1: memref<8x1xi32, #tpu.memory_space<vmem>>, %arg2: memref<2x8x32xf32, #tpu.memory_space<vmem>>, %arg3: memref<2x8x32xf32, #tpu.memory_space<vmem>>, %arg4: memref<16x32xbf16, #tpu.memory_space<vmem>>, %arg5: memref<64x128xbf16, #tpu.memory_space<vmem>>, %arg6: memref<64x128xbf16, #tpu.memory_space<vmem>>, %arg7: memref<1x128xf32, #tpu.memory_space<vmem>>, %arg8: memref<1x128xf32, #tpu.memory_space<vmem>>, %arg9: memref<32x128xbf16, #tpu.memory_space<vmem>>, %arg10: memref<1x128xf32, #tpu.memory_space<vmem>>, %arg11: memref<1x8x128xf32, #tpu.memory_space<vmem>>, %arg12: memref<2x8x32xf32, #tpu.memory_space<vmem>>, %arg13: memref<2x8x32xf32, #tpu.memory_space<vmem>>, %arg14: memref<8x1xi32, #tpu.memory_space<vmem>>) attributes {dimension_semantics = [#tpu.dimension_semantics<arbitrary>], iteration_bounds = array<i64: 6>, scalar_prefetch = 0 : i64, scratch_operands = 1 : i64, tpu.core_type = #tpu.core_type<tc>, window_params = [{pipeline_mode = #tpu.pipeline_mode<synchronous>, transform_indices = @transform_0, window_bounds = array<i64: 8, 1>}, {pipeline_mode = #tpu.pipeline_mode<synchronous>, transform_indices = @transform_1, window_bounds = array<i64: 2, 8, 32>}, {pipeline_mode = #tpu.pipeline_mode<synchronous>, transform_indices = @transform_2, window_bounds = array<i64: 2, 8, 32>}, {pipeline_mode = #tpu.pipeline_mode<synchronous>, transform_indices = @transform_3, window_bounds = array<i64: 16, 32>}, {pipeline_mode = #tpu.pipeline_mode<synchronous>, transform_indices = @transform_4, window_bounds = array<i64: 64, 128>}, {pipeline_mode = #tpu.pipeline_mode<synchronous>, transform_indices = @transform_5, window_bounds = array<i64: 64, 128>}, {pipeline_mode = #tpu.pipeline_mode<synchronous>, transform_indices = @transform_6, window_bounds = array<i64: 1, 128>}, {pipeline_mode = #tpu.pipeline_mode<synchronous>, transform_indices = @transform_7, window_bounds = array<i64: 1, 128>}, {pipeline_mode = #tpu.pipeline_mode<synchronous>, transform_indices = @transform_8, window_bounds = array<i64: 32, 128>}, {pipeline_mode = #tpu.pipeline_mode<synchronous>, transform_indices = @transform_9, window_bounds = array<i64: 1, 128>}, {transform_indices = @transform_10, window_bounds = array<i64: 1, 8, 128>}, {pipeline_mode = #tpu.pipeline_mode<synchronous>, transform_indices = @transform_11, window_bounds = array<i64: 2, 8, 32>}, {pipeline_mode = #tpu.pipeline_mode<synchronous>, transform_indices = @transform_12, window_bounds = array<i64: 2, 8, 32>}]} {
    %c0_i32 = arith.constant 0 : i32
    %0 = arith.cmpi eq, %arg0, %c0_i32 : i32
    %1 = arith.extui %0 : i1 to i32
    %c0_i32_0 = arith.constant 0 : i32
    %2 = arith.cmpi ne, %1, %c0_i32_0 : i32
    scf.if %2 {
      %c0_53 = arith.constant 0 : index
      %c0_54 = arith.constant 0 : index
      %96 = vector.load %arg1[%c0_53, %c0_54] : memref<8x1xi32, #tpu.memory_space<vmem>>, vector<8x1xi32>
      %c0_55 = arith.constant 0 : index
      %c0_56 = arith.constant 0 : index
      %97 = vector.load %arg14[%c0_55, %c0_56] : memref<8x1xi32, #tpu.memory_space<vmem>>, vector<8x1xi32>
      tpu.vector_store %arg14[%c0_55, %c0_56], %96 {strides = array<i32>} : memref<8x1xi32, #tpu.memory_space<vmem>>, vector<8x1xi32>,
      %c0_57 = arith.constant 0 : index
      %c0_58 = arith.constant 0 : index
      %c0_59 = arith.constant 0 : index
      %98 = vector.load %arg2[%c0_57, %c0_58, %c0_59] : memref<2x8x32xf32, #tpu.memory_space<vmem>>, vector<2x8x32xf32>
      %c0_60 = arith.constant 0 : index
      %c0_61 = arith.constant 0 : index
      %c0_62 = arith.constant 0 : index
      %99 = vector.load %arg12[%c0_60, %c0_61, %c0_62] : memref<2x8x32xf32, #tpu.memory_space<vmem>>, vector<2x8x32xf32>
      tpu.vector_store %arg12[%c0_60, %c0_61, %c0_62], %98 {strides = array<i32>} : memref<2x8x32xf32, #tpu.memory_space<vmem>>, vector<2x8x32xf32>,
      %c0_63 = arith.constant 0 : index
      %c0_64 = arith.constant 0 : index
      %c0_65 = arith.constant 0 : index
      %100 = vector.load %arg3[%c0_63, %c0_64, %c0_65] : memref<2x8x32xf32, #tpu.memory_space<vmem>>, vector<2x8x32xf32>
      %c0_66 = arith.constant 0 : index
      %c0_67 = arith.constant 0 : index
      %c0_68 = arith.constant 0 : index
      %101 = vector.load %arg13[%c0_66, %c0_67, %c0_68] : memref<2x8x32xf32, #tpu.memory_space<vmem>>, vector<2x8x32xf32>
      tpu.vector_store %arg13[%c0_66, %c0_67, %c0_68], %100 {strides = array<i32>} : memref<2x8x32xf32, #tpu.memory_space<vmem>>, vector<2x8x32xf32>,
    } else {
    }
    %c0 = arith.constant 0 : index
    %c0_1 = arith.constant 0 : index
    %3 = vector.load %arg14[%c0, %c0_1] : memref<8x1xi32, #tpu.memory_space<vmem>>, vector<8x1xi32>
    %4 = tpu.iota {dimensions = array<i32: 1>} : vector<8x16xi32>
    %5 = vector.broadcast %3 : vector<8x1xi32> to vector<8x16xi32>
    %6 = arith.cmpi eq, %5, %4 : vector<8x16xi32>
    %cst = arith.constant 1.000000e+00 : f32
    %cst_2 = arith.constant 0.000000e+00 : f32
    %7 = vector.broadcast %cst : f32 to vector<8x16xf32>
    %8 = vector.broadcast %cst_2 : f32 to vector<8x16xf32>
    %9 = arith.select %6, %7, %8 : vector<8x16xi1>, vector<8x16xf32>
    %10 = arith.truncf %9 : vector<8x16xf32> to vector<8x16xbf16>
    %c0_3 = arith.constant 0 : index
    %c0_4 = arith.constant 0 : index
    %11 = vector.load %arg4[%c0_3, %c0_4] : memref<16x32xbf16, #tpu.memory_space<vmem>>, vector<16x32xbf16>
    %cst_5 = arith.constant dense<0.000000e+00> : vector<8x32xf32>
    %12 = tpu.matmul %10, %11, %cst_5 {dimension_numbers = #tpu.dot_dimension_numbers<[1], [0], [0], [1], [0, 0, 1, 1], [], []>} : vector<8x16xbf16>, vector<16x32xbf16>, vector<8x32xf32> -> vector<8x32xf32>
    %c0_6 = arith.constant 0 : index
    %c0_7 = arith.constant 0 : index
    %c0_8 = arith.constant 0 : index
    %13 = vector.load %arg12[%c0_6, %c0_7, %c0_8] : memref<2x8x32xf32, #tpu.memory_space<vmem>>, vector<1x8x32xf32>
    %14 = vector.shape_cast %13 : vector<1x8x32xf32> to vector<8x32xf32>
    %c0_9 = arith.constant 0 : index
    %c0_10 = arith.constant 0 : index
    %c0_11 = arith.constant 0 : index
    %15 = vector.load %arg13[%c0_9, %c0_10, %c0_11] : memref<2x8x32xf32, #tpu.memory_space<vmem>>, vector<1x8x32xf32>
    %16 = vector.shape_cast %15 : vector<1x8x32xf32> to vector<8x32xf32>
    %17 = tpu.concatenate %12, %14 in 1 : vector<8x32xf32>, vector<8x32xf32> -> vector<8x64xf32>
    %18 = arith.truncf %17 : vector<8x64xf32> to vector<8x64xbf16>
    %c0_12 = arith.constant 0 : index
    %c0_13 = arith.constant 0 : index
    %19 = vector.load %arg5[%c0_12, %c0_13] : memref<64x128xbf16, #tpu.memory_space<vmem>>, vector<64x128xbf16>
    %cst_14 = arith.constant dense<0.000000e+00> : vector<8x128xf32>
    %20 = tpu.matmul %18, %19, %cst_14 {dimension_numbers = #tpu.dot_dimension_numbers<[1], [0], [0], [1], [0, 0, 1, 1], [], []>} : vector<8x64xbf16>, vector<64x128xbf16>, vector<8x128xf32> -> vector<8x128xf32>
    %c0_15 = arith.constant 0 : index
    %c0_16 = arith.constant 0 : index
    %21 = vector.load %arg7[%c0_15, %c0_16] : memref<1x128xf32, #tpu.memory_space<vmem>>, vector<1x128xf32>
    %22 = vector.broadcast %21 : vector<1x128xf32> to vector<8x128xf32>
    %23 = arith.addf %20, %22 : vector<8x128xf32>
    %24 = arith.negf %23 : vector<8x128xf32>
    %25 = math.exp %24 : vector<8x128xf32>
    %cst_17 = arith.constant 1.000000e+00 : f32
    %26 = vector.broadcast %cst_17 : f32 to vector<8x128xf32>
    %27 = arith.addf %26, %25 : vector<8x128xf32>
    %28 = arith.divf %26, %27 : vector<8x128xf32>
    %29 = math.tanh %23 : vector<8x128xf32>
    %30 = vector.extract_strided_slice %28 {offsets = [0, 0], sizes = [8, 32], strides = [1, 1]} : vector<8x128xf32> to vector<8x32xf32>
    %31 = vector.extract_strided_slice %28 {offsets = [0, 32], sizes = [8, 32], strides = [1, 1]} : vector<8x128xf32> to vector<8x32xf32>
    %32 = vector.extract_strided_slice %29 {offsets = [0, 64], sizes = [8, 32], strides = [1, 1]} : vector<8x128xf32> to vector<8x32xf32>
    %33 = vector.extract_strided_slice %28 {offsets = [0, 96], sizes = [8, 32], strides = [1, 1]} : vector<8x128xf32> to vector<8x32xf32>
    %34 = arith.mulf %31, %16 : vector<8x32xf32>
    %35 = arith.mulf %30, %32 : vector<8x32xf32>
    %36 = arith.addf %34, %35 : vector<8x32xf32>
    %37 = math.tanh %36 : vector<8x32xf32>
    %38 = arith.mulf %33, %37 : vector<8x32xf32>
    %c0_18 = arith.constant 0 : index
    %c0_19 = arith.constant 0 : index
    %c0_20 = arith.constant 0 : index
    %39 = vector.load %arg12[%c0_18, %c0_19, %c0_20] : memref<2x8x32xf32, #tpu.memory_space<vmem>>, vector<1x8x32xf32>
    %40 = vector.shape_cast %39 : vector<1x8x32xf32> to vector<8x32xf32>
    %41 = vector.shape_cast %38 : vector<8x32xf32> to vector<1x8x32xf32>
    tpu.vector_store %arg12[%c0_18, %c0_19, %c0_20], %41 {strides = array<i32>} : memref<2x8x32xf32, #tpu.memory_space<vmem>>, vector<1x8x32xf32>,
    %c0_21 = arith.constant 0 : index
    %c0_22 = arith.constant 0 : index
    %c0_23 = arith.constant 0 : index
    %42 = vector.load %arg13[%c0_21, %c0_22, %c0_23] : memref<2x8x32xf32, #tpu.memory_space<vmem>>, vector<1x8x32xf32>
    %43 = vector.shape_cast %42 : vector<1x8x32xf32> to vector<8x32xf32>
    %44 = vector.shape_cast %36 : vector<8x32xf32> to vector<1x8x32xf32>
    tpu.vector_store %arg13[%c0_21, %c0_22, %c0_23], %44 {strides = array<i32>} : memref<2x8x32xf32, #tpu.memory_space<vmem>>, vector<1x8x32xf32>,
    %c1 = arith.constant 1 : index
    %c0_24 = arith.constant 0 : index
    %c0_25 = arith.constant 0 : index
    %45 = vector.load %arg12[%c1, %c0_24, %c0_25] : memref<2x8x32xf32, #tpu.memory_space<vmem>>, vector<1x8x32xf32>
    %46 = vector.shape_cast %45 : vector<1x8x32xf32> to vector<8x32xf32>
    %c1_26 = arith.constant 1 : index
    %c0_27 = arith.constant 0 : index
    %c0_28 = arith.constant 0 : index
    %47 = vector.load %arg13[%c1_26, %c0_27, %c0_28] : memref<2x8x32xf32, #tpu.memory_space<vmem>>, vector<1x8x32xf32>
    %48 = vector.shape_cast %47 : vector<1x8x32xf32> to vector<8x32xf32>
    %49 = tpu.concatenate %38, %46 in 1 : vector<8x32xf32>, vector<8x32xf32> -> vector<8x64xf32>
    %50 = arith.truncf %49 : vector<8x64xf32> to vector<8x64xbf16>
    %c0_29 = arith.constant 0 : index
    %c0_30 = arith.constant 0 : index
    %51 = vector.load %arg6[%c0_29, %c0_30] : memref<64x128xbf16, #tpu.memory_space<vmem>>, vector<64x128xbf16>
    %cst_31 = arith.constant dense<0.000000e+00> : vector<8x128xf32>
    %52 = tpu.matmul %50, %51, %cst_31 {dimension_numbers = #tpu.dot_dimension_numbers<[1], [0], [0], [1], [0, 0, 1, 1], [], []>} : vector<8x64xbf16>, vector<64x128xbf16>, vector<8x128xf32> -> vector<8x128xf32>
    %c0_32 = arith.constant 0 : index
    %c0_33 = arith.constant 0 : index
    %53 = vector.load %arg8[%c0_32, %c0_33] : memref<1x128xf32, #tpu.memory_space<vmem>>, vector<1x128xf32>
    %54 = vector.broadcast %53 : vector<1x128xf32> to vector<8x128xf32>
    %55 = arith.addf %52, %54 : vector<8x128xf32>
    %56 = arith.negf %55 : vector<8x128xf32>
    %57 = math.exp %56 : vector<8x128xf32>
    %cst_34 = arith.constant 1.000000e+00 : f32
    %58 = vector.broadcast %cst_34 : f32 to vector<8x128xf32>
    %59 = arith.addf %58, %57 : vector<8x128xf32>
    %60 = arith.divf %58, %59 : vector<8x128xf32>
    %61 = math.tanh %55 : vector<8x128xf32>
    %62 = vector.extract_strided_slice %60 {offsets = [0, 0], sizes = [8, 32], strides = [1, 1]} : vector<8x128xf32> to vector<8x32xf32>
    %63 = vector.extract_strided_slice %60 {offsets = [0, 32], sizes = [8, 32], strides = [1, 1]} : vector<8x128xf32> to vector<8x32xf32>
    %64 = vector.extract_strided_slice %61 {offsets = [0, 64], sizes = [8, 32], strides = [1, 1]} : vector<8x128xf32> to vector<8x32xf32>
    %65 = vector.extract_strided_slice %60 {offsets = [0, 96], sizes = [8, 32], strides = [1, 1]} : vector<8x128xf32> to vector<8x32xf32>
    %66 = arith.mulf %63, %48 : vector<8x32xf32>
    %67 = arith.mulf %62, %64 : vector<8x32xf32>
    %68 = arith.addf %66, %67 : vector<8x32xf32>
    %69 = math.tanh %68 : vector<8x32xf32>
    %70 = arith.mulf %65, %69 : vector<8x32xf32>
    %c1_35 = arith.constant 1 : index
    %c0_36 = arith.constant 0 : index
    %c0_37 = arith.constant 0 : index
    %71 = vector.load %arg12[%c1_35, %c0_36, %c0_37] : memref<2x8x32xf32, #tpu.memory_space<vmem>>, vector<1x8x32xf32>
    %72 = vector.shape_cast %71 : vector<1x8x32xf32> to vector<8x32xf32>
    %73 = vector.shape_cast %70 : vector<8x32xf32> to vector<1x8x32xf32>
    tpu.vector_store %arg12[%c1_35, %c0_36, %c0_37], %73 {strides = array<i32>} : memref<2x8x32xf32, #tpu.memory_space<vmem>>, vector<1x8x32xf32>,
    %c1_38 = arith.constant 1 : index
    %c0_39 = arith.constant 0 : index
    %c0_40 = arith.constant 0 : index
    %74 = vector.load %arg13[%c1_38, %c0_39, %c0_40] : memref<2x8x32xf32, #tpu.memory_space<vmem>>, vector<1x8x32xf32>
    %75 = vector.shape_cast %74 : vector<1x8x32xf32> to vector<8x32xf32>
    %76 = vector.shape_cast %68 : vector<8x32xf32> to vector<1x8x32xf32>
    tpu.vector_store %arg13[%c1_38, %c0_39, %c0_40], %76 {strides = array<i32>} : memref<2x8x32xf32, #tpu.memory_space<vmem>>, vector<1x8x32xf32>,
    %77 = arith.truncf %70 : vector<8x32xf32> to vector<8x32xbf16>
    %c0_41 = arith.constant 0 : index
    %c0_42 = arith.constant 0 : index
    %78 = vector.load %arg9[%c0_41, %c0_42] : memref<32x128xbf16, #tpu.memory_space<vmem>>, vector<32x128xbf16>
    %cst_43 = arith.constant dense<0.000000e+00> : vector<8x128xf32>
    %79 = tpu.matmul %77, %78, %cst_43 {dimension_numbers = #tpu.dot_dimension_numbers<[1], [0], [0], [1], [0, 0, 1, 1], [], []>} : vector<8x32xbf16>, vector<32x128xbf16>, vector<8x128xf32> -> vector<8x128xf32>
    %c0_44 = arith.constant 0 : index
    %c0_45 = arith.constant 0 : index
    %80 = vector.load %arg10[%c0_44, %c0_45] : memref<1x128xf32, #tpu.memory_space<vmem>>, vector<1x128xf32>
    %81 = vector.broadcast %80 : vector<1x128xf32> to vector<8x128xf32>
    %82 = arith.addf %79, %81 : vector<8x128xf32>
    %c0_46 = arith.constant 0 : index
    %c0_47 = arith.constant 0 : index
    %c0_48 = arith.constant 0 : index
    %83 = vector.load %arg11[%c0_46, %c0_47, %c0_48] : memref<1x8x128xf32, #tpu.memory_space<vmem>>, vector<1x8x128xf32>
    %84 = vector.shape_cast %83 : vector<1x8x128xf32> to vector<8x128xf32>
    %85 = vector.shape_cast %82 : vector<8x128xf32> to vector<1x8x128xf32>
    tpu.vector_store %arg11[%c0_46, %c0_47, %c0_48], %85 {strides = array<i32>} : memref<1x8x128xf32, #tpu.memory_space<vmem>>, vector<1x8x128xf32>,
    %cst_49 = arith.constant dense<0xFF800000> : vector<8xf32>
    %86 = vector.multi_reduction <maximumf>, %82, %cst_49 [1] : vector<8x128xf32> to vector<8xf32>
    %87 = vector.shape_cast %86 : vector<8xf32> to vector<8x1xf32>
    %88 = tpu.iota {dimensions = array<i32: 1>} : vector<8x128xi32>
    %89 = vector.broadcast %87 : vector<8x1xf32> to vector<8x128xf32>
    %90 = arith.cmpf oeq, %82, %89 : vector<8x128xf32>
    %c128_i32 = arith.constant 128 : i32
    %91 = vector.broadcast %c128_i32 : i32 to vector<8x128xi32>
    %92 = arith.select %90, %88, %91 : vector<8x128xi1>, vector<8x128xi32>
    %cst_50 = arith.constant dense<2147483647> : vector<8xi32>
    %93 = vector.multi_reduction <minsi>, %92, %cst_50 [1] : vector<8x128xi32> to vector<8xi32>
    %94 = vector.shape_cast %93 : vector<8xi32> to vector<8x1xi32>
    %c0_51 = arith.constant 0 : index
    %c0_52 = arith.constant 0 : index
    %95 = vector.load %arg14[%c0_51, %c0_52] : memref<8x1xi32, #tpu.memory_space<vmem>>, vector<8x1xi32>
    tpu.vector_store %arg14[%c0_51, %c0_52], %94 {strides = array<i32>} : memref<8x1xi32, #tpu.memory_space<vmem>>, vector<8x1xi32>,
    return
  }
  func.func @transform_0(%arg0: i32) -> (i32, i32) {
    %c0_i32 = arith.constant 0 : i32
    %c0_i32_0 = arith.constant 0 : i32
    %c0_i32_1 = arith.constant 0 : i32
    return %c0_i32, %c0_i32_0 : i32, i32
  }
  func.func @transform_1(%arg0: i32) -> (i32, i32, i32) {
    %c0_i32 = arith.constant 0 : i32
    %c0_i32_0 = arith.constant 0 : i32
    %c0_i32_1 = arith.constant 0 : i32
    %c0_i32_2 = arith.constant 0 : i32
    return %c0_i32, %c0_i32_0, %c0_i32_1 : i32, i32, i32
  }
  func.func @transform_2(%arg0: i32) -> (i32, i32, i32) {
    %c0_i32 = arith.constant 0 : i32
    %c0_i32_0 = arith.constant 0 : i32
    %c0_i32_1 = arith.constant 0 : i32
    %c0_i32_2 = arith.constant 0 : i32
    return %c0_i32, %c0_i32_0, %c0_i32_1 : i32, i32, i32
  }
  func.func @transform_3(%arg0: i32) -> (i32, i32) {
    %c0_i32 = arith.constant 0 : i32
    %c0_i32_0 = arith.constant 0 : i32
    %c0_i32_1 = arith.constant 0 : i32
    return %c0_i32, %c0_i32_0 : i32, i32
  }
  func.func @transform_4(%arg0: i32) -> (i32, i32) {
    %c0_i32 = arith.constant 0 : i32
    %c0_i32_0 = arith.constant 0 : i32
    %c0_i32_1 = arith.constant 0 : i32
    return %c0_i32, %c0_i32_0 : i32, i32
  }
  func.func @transform_5(%arg0: i32) -> (i32, i32) {
    %c0_i32 = arith.constant 0 : i32
    %c0_i32_0 = arith.constant 0 : i32
    %c0_i32_1 = arith.constant 0 : i32
    return %c0_i32, %c0_i32_0 : i32, i32
  }
  func.func @transform_6(%arg0: i32) -> (i32, i32) {
    %c0_i32 = arith.constant 0 : i32
    %c0_i32_0 = arith.constant 0 : i32
    %c0_i32_1 = arith.constant 0 : i32
    return %c0_i32, %c0_i32_0 : i32, i32
  }
  func.func @transform_7(%arg0: i32) -> (i32, i32) {
    %c0_i32 = arith.constant 0 : i32
    %c0_i32_0 = arith.constant 0 : i32
    %c0_i32_1 = arith.constant 0 : i32
    return %c0_i32, %c0_i32_0 : i32, i32
  }
  func.func @transform_8(%arg0: i32) -> (i32, i32) {
    %c0_i32 = arith.constant 0 : i32
    %c0_i32_0 = arith.constant 0 : i32
    %c0_i32_1 = arith.constant 0 : i32
    return %c0_i32, %c0_i32_0 : i32, i32
  }
  func.func @transform_9(%arg0: i32) -> (i32, i32) {
    %c0_i32 = arith.constant 0 : i32
    %c0_i32_0 = arith.constant 0 : i32
    %c0_i32_1 = arith.constant 0 : i32
    return %c0_i32, %c0_i32_0 : i32, i32
  }
  func.func @transform_10(%arg0: i32) -> (i32, i32, i32) {
    %c0_i32 = arith.constant 0 : i32
    %c0_i32_0 = arith.constant 0 : i32
    %c0_i32_1 = arith.constant 0 : i32
    return %arg0, %c0_i32, %c0_i32_0 : i32, i32, i32
  }
  func.func @transform_11(%arg0: i32) -> (i32, i32, i32) {
    %c0_i32 = arith.constant 0 : i32
    %c0_i32_0 = arith.constant 0 : i32
    %c0_i32_1 = arith.constant 0 : i32
    %c0_i32_2 = arith.constant 0 : i32
    return %c0_i32, %c0_i32_0, %c0_i32_1 : i32, i32, i32
  }
  func.func @transform_12(%arg0: i32) -> (i32, i32, i32) {
    %c0_i32 = arith.constant 0 : i32
    %c0_i32_0 = arith.constant 0 : i32
    %c0_i32_1 = arith.constant 0 : i32
    %c0_i32_2 = arith.constant 0 : i32
    return %c0_i32, %c0_i32_0, %c0_i32_1 : i32, i32, i32
  }
}

</mosaic_0001>

<llo_original>
// kernel: tpu_custom_call.1
$region0: #{tpu_custom_call.1}
  #allocation0 [shape = 'u32[]', space=smem, size = 0x4, offset = 0x4, fixed_abs, tag = 'smem constant byte address 0x4 - core index']
  #allocation1 [shape = 'u32[72,128]{1,0:T(1,128)}', space=vmem, size = 0x9000, scoped, tag = 'internal scratch']
  #allocation2 [shape = 's32[8,1]{1,0:T(8,128)}', space=vmem, size = 0x1000, scoped, tag = 'scratch operand']
  %s0 = inlined_call_operand.vmem [shape: s32[8,1], index: 0, kind: input, shape index: {}]
  %s1 = inlined_call_operand.hbm [shape: f32[2,8,32], index: 1, kind: input, shape index: {}]
  %s2 = inlined_call_operand.hbm [shape: f32[2,8,32], index: 2, kind: input, shape index: {}]
  %s3 = inlined_call_operand.hbm [shape: bf16[16,32], index: 3, kind: input, shape index: {}]
  %s4 = inlined_call_operand.hbm [shape: bf16[64,128], index: 4, kind: input, shape index: {}]
  %s5 = inlined_call_operand.hbm [shape: bf16[64,128], index: 5, kind: input, shape index: {}]
  %s6 = inlined_call_operand.hbm [shape: f32[1,128], index: 6, kind: input, shape index: {}]
  %s7 = inlined_call_operand.hbm [shape: f32[1,128], index: 7, kind: input, shape index: {}]
  %s8 = inlined_call_operand.vmem [shape: bf16[32,128], index: 8, kind: input, shape index: {}]
  %s9 = inlined_call_operand.vmem [shape: f32[1,128], index: 9, kind: input, shape index: {}]
  %s10 = inlined_call_operand.hbm [shape: f32[6,8,128], index: 10, kind: output, shape index: {0}]
  %s11 = inlined_call_operand.hbm [shape: f32[2,8,32], index: 11, kind: output, shape index: {1}]
  %s12 = inlined_call_operand.hbm [shape: f32[2,8,32], index: 12, kind: output, shape index: {2}]
  %13 = xla_tuple %s10, %s11, %s12
  %s14 = sld [smem:[#allocation0]]
  $region121: #{tpu_custom_call.1} parent=0
    _
  %s16 = ssub.s32 1, %s14
  %s17 = scalar_select 0, %s16, %s14
  $region1: #{tpu_custom_call.1} parent=0
    #allocation3 [shape = 'u8[8192]{0}', space=vmem, size = 0x2000, scoped, tag = 'input window, operand 1, single buffered']
    #allocation4 [shape = 's32[2]{0}', space=sflag, size = 0x8, scoped, tag = 'scoped memory for tpu_custom_call.1']
    #allocation5 [shape = 's32[2]{0}', space=sflag, size = 0x8, scoped, tag = 'scoped memory for tpu_custom_call.1']
    #allocation6 [shape = 'u8[8192]{0}', space=vmem, size = 0x2000, scoped, tag = 'input window, operand 2, single buffered']
    #allocation7 [shape = 's32[1]{0}', space=sflag, size = 0x4, scoped, tag = 'scoped memory for tpu_custom_call.1']
    #allocation8 [shape = 'u8[4096]{0}', space=vmem, size = 0x1000, scoped, tag = 'input window, operand 3, single buffered']
    #allocation9 [shape = 'u8[16384]{0}', space=vmem, size = 0x4000, scoped, tag = 'input window, operand 4, single buffered']
    #allocation10 [shape = 's32[1]{0}', space=sflag, size = 0x4, scoped, tag = 'scoped memory for tpu_custom_call.1']
    #allocation11 [shape = 'u8[16384]{0}', space=vmem, size = 0x4000, scoped, tag = 'input window, operand 5, single buffered']
    #allocation12 [shape = 'u8[512]{0}', space=vmem, size = 0x400, scoped, tag = 'input window, operand 6, single buffered']
    #allocation13 [shape = 's32[1]{0}', space=sflag, size = 0x4, scoped, tag = 'scoped memory for tpu_custom_call.1']
    #allocation14 [shape = 'u8[512]{0}', space=vmem, size = 0x400, scoped, tag = 'input window, operand 7, single buffered']
    #allocation15 [shape = 'u8[8192]{0}', space=vmem, size = 0x2000, scoped, tag = 'output window, operand 0']
    #allocation16 [shape = 'u8[8192]{0}', space=vmem, size = 0x2000, scoped, tag = 'output window, operand 1, single buffered']
    #allocation17 [shape = 's32[1]{0}', space=sflag, size = 0x4, scoped, tag = 'scoped memory for tpu_custom_call.1']
    #allocation18 [shape = 'u8[8192]{0}', space=vmem, size = 0x2000, scoped, tag = 'output window, operand 2, single buffered']
    %18 = vsyncpa [#allocation4], 0
    %19 = vsyncpa [#allocation7], 0
    %20 = vsyncpa [#allocation10], 0
    %21 = vsyncpa [#allocation13], 0
    %22 = vsyncpa [#allocation5], 0
    %s23 = scalar_lea.sflag [#allocation5], 1
    %24 = vsyncpa %s23, 0
    %25 = vsyncpa [#allocation17], 0
    loop: start=0, step=1, limit=8
    $region2: #{tpu_custom_call.1} parent=1 // loop_pre_header
      _
    $region3: #{tpu_custom_call.1} parent=1 // loop_header
      %s27 = sphi 0, %s31
      %p28 = scmp.ge.s32.totalorder %s27, 8
      %s35 = sphi 0, %s35
      %s37 = sphi 0, %s35
      %s38 = sphi 0, %s37
      %s52 = sphi 0, %s38
      %s56 = sphi 0, %s56
      %s58 = sphi 0, %s56
      %s59 = sphi 0, %s58
      %s73 = sphi 0, %s59
      %s77 = sphi 0, %s77
      %s79 = sphi 0, %s77
      %s80 = sphi 0, %s79
      %s94 = sphi 0, %s80
      %s98 = sphi 0, %s98
      %s100 = sphi 0, %s98
      %s101 = sphi 0, %s100
      %s115 = sphi 0, %s101
      %s119 = sphi 0, %s119
      %s121 = sphi 0, %s119
      %s122 = sphi 0, %s121
      %s136 = sphi 0, %s122
      %s140 = sphi 0, %s140
      %s142 = sphi 0, %s140
      %s143 = sphi 0, %s142
      %s157 = sphi 0, %s143
      %s161 = sphi 0, %s161
      %s163 = sphi 0, %s161
      %s164 = sphi 0, %s163
      %s178 = sphi 0, %s164
      %s182 = sphi 0, %s182
      %s184 = sphi 0, %s182
      %s185 = sphi 0, %s184
      %s199 = sphi 0, %s185
      %s203 = sphi 0, %s203
      %s205 = sphi 0, %s203
      %s206 = sphi 0, %s205
      %s220 = sphi 0, %s206
      %s224 = sphi 0, %s224
      %s226 = sphi 0, %s224
      %s227 = sphi 0, %s226
      %s241 = sphi 0, %s227
      %s247 = sphi 0, %s249
      %s250 = sphi 0, %s247
      %s251 = sphi 0, %s250
      %s267 = sphi 0, %s251
      %s271 = sphi 0, %s271
      %s273 = sphi 0, %s271
      %s274 = sphi 0, %s273
      %s288 = sphi 0, %s274
      %s292 = sphi 0, %s292
      %s294 = sphi 0, %s292
      %s295 = sphi 0, %s294
      %s309 = sphi 0, %s295
    $region4: #{tpu_custom_call.1} parent=1 // loop_header_branch
      %30 = sbr.rel (%p28) target = $region8
    $region5: #{tpu_custom_call.1} parent=1 // loop_body
      %s32 = ssub.s32 %s27, 1
      %s33 = ssub.s32 %s27, 2
      %s34 = sadd.s32 %s27, 1
      %s36 = sadd.s32 %s35, 1
      %p39 = scmp.eq.s32.totalorder %s27, 5
      %p40 = scmp.ne.s32.totalorder %s35, %s37
      %p41 = scmp.eq.s32.totalorder %s27, 0
      %p42 = por %p40, %p41
      %p43 = scmp.ne.s32.totalorder %s35, %s37
      %p44 = scmp.eq.s32.totalorder %s32, 5
      %p45 = por %p43, %p44
      %p46 = scmp.ne.s32.totalorder %s37, %s38
      %p47 = scmp.eq.s32.totalorder %s32, 0
      %p48 = por %p46, %p47
      %p49 = scmp.ne.s32.totalorder %s37, %s38
      %p50 = scmp.eq.s32.totalorder %s33, 5
      %p51 = por %p49, %p50
      %p53 = scmp.ne.s32.totalorder %s38, %s52
      %p54 = scmp.eq.s32.totalorder %s33, 0
      %p55 = por %p53, %p54
      %s57 = sadd.s32 %s56, 1
      %p60 = scmp.eq.s32.totalorder %s27, 5
      %p61 = scmp.ne.s32.totalorder %s56, %s58
      %p62 = scmp.eq.s32.totalorder %s27, 0
      %p63 = por %p61, %p62
      %p64 = scmp.ne.s32.totalorder %s56, %s58
      %p65 = scmp.eq.s32.totalorder %s32, 5
      %p66 = por %p64, %p65
      %p67 = scmp.ne.s32.totalorder %s58, %s59
      %p68 = scmp.eq.s32.totalorder %s32, 0
      %p69 = por %p67, %p68
      %p70 = scmp.ne.s32.totalorder %s58, %s59
      %p71 = scmp.eq.s32.totalorder %s33, 5
      %p72 = por %p70, %p71
      %p74 = scmp.ne.s32.totalorder %s59, %s73
      %p75 = scmp.eq.s32.totalorder %s33, 0
      %p76 = por %p74, %p75
      %s78 = sadd.s32 %s77, 1
      %p81 = scmp.eq.s32.totalorder %s27, 5
      %p82 = scmp.ne.s32.totalorder %s77, %s79
      %p83 = scmp.eq.s32.totalorder %s27, 0
      %p84 = por %p82, %p83
      %p85 = scmp.ne.s32.totalorder %s77, %s79
      %p86 = scmp.eq.s32.totalorder %s32, 5
      %p87 = por %p85, %p86
      %p88 = scmp.ne.s32.totalorder %s79, %s80
      %p89 = scmp.eq.s32.totalorder %s32, 0
      %p90 = por %p88, %p89
      %p91 = scmp.ne.s32.totalorder %s79, %s80
      %p92 = scmp.eq.s32.totalorder %s33, 5
      %p93 = por %p91, %p92
      %p95 = scmp.ne.s32.totalorder %s80, %s94
      %p96 = scmp.eq.s32.totalorder %s33, 0
      %p97 = por %p95, %p96
      %s99 = sadd.s32 %s98, 1
      %p102 = scmp.eq.s32.totalorder %s27, 5
      %p103 = scmp.ne.s32.totalorder %s98, %s100
      %p104 = scmp.eq.s32.totalorder %s27, 0
      %p105 = por %p103, %p104
      %p106 = scmp.ne.s32.totalorder %s98, %s100
      %p107 = scmp.eq.s32.totalorder %s32, 5
      %p108 = por %p106, %p107
      %p109 = scmp.ne.s32.totalorder %s100, %s101
      %p110 = scmp.eq.s32.totalorder %s32, 0
      %p111 = por %p109, %p110
      %p112 = scmp.ne.s32.totalorder %s100, %s101
      %p113 = scmp.eq.s32.totalorder %s33, 5
      %p114 = por %p112, %p113
      %p116 = scmp.ne.s32.totalorder %s101, %s115
      %p117 = scmp.eq.s32.totalorder %s33, 0
      %p118 = por %p116, %p117
      %s120 = sadd.s32 %s119, 1
      %p123 = scmp.eq.s32.totalorder %s27, 5
      %p124 = scmp.ne.s32.totalorder %s119, %s121
      %p125 = scmp.eq.s32.totalorder %s27, 0
      %p126 = por %p124, %p125
      %p127 = scmp.ne.s32.totalorder %s119, %s121
      %p128 = scmp.eq.s32.totalorder %s32, 5
      %p129 = por %p127, %p128
      %p130 = scmp.ne.s32.totalorder %s121, %s122
      %p131 = scmp.eq.s32.totalorder %s32, 0
      %p132 = por %p130, %p131
      %p133 = scmp.ne.s32.totalorder %s121, %s122
      %p134 = scmp.eq.s32.totalorder %s33, 5
      %p135 = por %p133, %p134
      %p137 = scmp.ne.s32.totalorder %s122, %s136
      %p138 = scmp.eq.s32.totalorder %s33, 0
      %p139 = por %p137, %p138
      %s141 = sadd.s32 %s140, 1
      %p144 = scmp.eq.s32.totalorder %s27, 5
      %p145 = scmp.ne.s32.totalorder %s140, %s142
      %p146 = scmp.eq.s32.totalorder %s27, 0
      %p147 = por %p145, %p146
      %p148 = scmp.ne.s32.totalorder %s140, %s142
      %p149 = scmp.eq.s32.totalorder %s32, 5
      %p150 = por %p148, %p149
      %p151 = scmp.ne.s32.totalorder %s142, %s143
      %p152 = scmp.eq.s32.totalorder %s32, 0
      %p153 = por %p151, %p152
      %p154 = scmp.ne.s32.totalorder %s142, %s143
      %p155 = scmp.eq.s32.totalorder %s33, 5
      %p156 = por %p154, %p155
      %p158 = scmp.ne.s32.totalorder %s143, %s157
      %p159 = scmp.eq.s32.totalorder %s33, 0
      %p160 = por %p158, %p159
      %s162 = sadd.s32 %s161, 1
      %p165 = scmp.eq.s32.totalorder %s27, 5
      %p166 = scmp.ne.s32.totalorder %s161, %s163
      %p167 = scmp.eq.s32.totalorder %s27, 0
      %p168 = por %p166, %p167
      %p169 = scmp.ne.s32.totalorder %s161, %s163
      %p170 = scmp.eq.s32.totalorder %s32, 5
      %p171 = por %p169, %p170
      %p172 = scmp.ne.s32.totalorder %s163, %s164
      %p173 = scmp.eq.s32.totalorder %s32, 0
      %p174 = por %p172, %p173
      %p175 = scmp.ne.s32.totalorder %s163, %s164
      %p176 = scmp.eq.s32.totalorder %s33, 5
      %p177 = por %p175, %p176
      %p179 = scmp.ne.s32.totalorder %s164, %s178
      %p180 = scmp.eq.s32.totalorder %s33, 0
      %p181 = por %p179, %p180
      %s183 = sadd.s32 %s182, 1
      %p186 = scmp.eq.s32.totalorder %s27, 5
      %p187 = scmp.ne.s32.totalorder %s182, %s184
      %p188 = scmp.eq.s32.totalorder %s27, 0
      %p189 = por %p187, %p188
      %p190 = scmp.ne.s32.totalorder %s182, %s184
      %p191 = scmp.eq.s32.totalorder %s32, 5
      %p192 = por %p190, %p191
      %p193 = scmp.ne.s32.totalorder %s184, %s185
      %p194 = scmp.eq.s32.totalorder %s32, 0
      %p195 = por %p193, %p194
      %p196 = scmp.ne.s32.totalorder %s184, %s185
      %p197 = scmp.eq.s32.totalorder %s33, 5
      %p198 = por %p196, %p197
      %p200 = scmp.ne.s32.totalorder %s185, %s199
      %p201 = scmp.eq.s32.totalorder %s33, 0
      %p202 = por %p200, %p201
      %s204 = sadd.s32 %s203, 1
      %p207 = scmp.eq.s32.totalorder %s27, 5
      %p208 = scmp.ne.s32.totalorder %s203, %s205
      %p209 = scmp.eq.s32.totalorder %s27, 0
      %p210 = por %p208, %p209
      %p211 = scmp.ne.s32.totalorder %s203, %s205
      %p212 = scmp.eq.s32.totalorder %s32, 5
      %p213 = por %p211, %p212
      %p214 = scmp.ne.s32.totalorder %s205, %s206
      %p215 = scmp.eq.s32.totalorder %s32, 0
      %p216 = por %p214, %p215
      %p217 = scmp.ne.s32.totalorder %s205, %s206
      %p218 = scmp.eq.s32.totalorder %s33, 5
      %p219 = por %p217, %p218
      %p221 = scmp.ne.s32.totalorder %s206, %s220
      %p222 = scmp.eq.s32.totalorder %s33, 0
      %p223 = por %p221, %p222
      %s225 = sadd.s32 %s224, 1
      %p228 = scmp.eq.s32.totalorder %s27, 5
      %p229 = scmp.ne.s32.totalorder %s224, %s226
      %p230 = scmp.eq.s32.totalorder %s27, 0
      %p231 = por %p229, %p230
      %p232 = scmp.ne.s32.totalorder %s224, %s226
      %p233 = scmp.eq.s32.totalorder %s32, 5
      %p234 = por %p232, %p233
      %p235 = scmp.ne.s32.totalorder %s226, %s227
      %p236 = scmp.eq.s32.totalorder %s32, 0
      %p237 = por %p235, %p236
      %p238 = scmp.ne.s32.totalorder %s226, %s227
      %p239 = scmp.eq.s32.totalorder %s33, 5
      %p240 = por %p238, %p239
      %p242 = scmp.ne.s32.totalorder %s227, %s241
      %p243 = scmp.eq.s32.totalorder %s33, 0
      %p244 = por %p242, %p243
      %s245 = ssub.s32 %s27, %s34
      %p246 = scmp.eq.s32.totalorder %s245, 0
      %s248 = sadd.s32 %s247, 1
      %s249 = scalar_select %p246, %s247, %s248
      %p252 = pneg %p246
      %p253 = scmp.eq.s32.totalorder %s27, 5
      %p254 = por %p252, %p253
      %p255 = scmp.ne.s32.totalorder %s247, %s250
      %p256 = scmp.eq.s32.totalorder %s27, 0
      %p257 = por %p255, %p256
      %p258 = scmp.ne.s32.totalorder %s247, %s250
      %p259 = scmp.eq.s32.totalorder %s32, 5
      %p260 = por %p258, %p259
      %p261 = scmp.ne.s32.totalorder %s250, %s251
      %p262 = scmp.eq.s32.totalorder %s32, 0
      %p263 = por %p261, %p262
      %p264 = scmp.ne.s32.totalorder %s250, %s251
      %p265 = scmp.eq.s32.totalorder %s33, 5
      %p266 = por %p264, %p265
      %p268 = scmp.ne.s32.totalorder %s251, %s267
      %p269 = scmp.eq.s32.totalorder %s33, 0
      %p270 = por %p268, %p269
      %s272 = sadd.s32 %s271, 1
      %p275 = scmp.eq.s32.totalorder %s27, 5
      %p276 = scmp.ne.s32.totalorder %s271, %s273
      %p277 = scmp.eq.s32.totalorder %s27, 0
      %p278 = por %p276, %p277
      %p279 = scmp.ne.s32.totalorder %s271, %s273
      %p280 = scmp.eq.s32.totalorder %s32, 5
      %p281 = por %p279, %p280
      %p282 = scmp.ne.s32.totalorder %s273, %s274
      %p283 = scmp.eq.s32.totalorder %s32, 0
      %p284 = por %p282, %p283
      %p285 = scmp.ne.s32.totalorder %s273, %s274
      %p286 = scmp.eq.s32.totalorder %s33, 5
      %p287 = por %p285, %p286
      %p289 = scmp.ne.s32.totalorder %s274, %s288
      %p290 = scmp.eq.s32.totalorder %s33, 0
      %p291 = por %p289, %p290
      %s293 = sadd.s32 %s292, 1
      %p296 = scmp.eq.s32.totalorder %s27, 5
      %p297 = scmp.ne.s32.totalorder %s292, %s294
      %p298 = scmp.eq.s32.totalorder %s27, 0
      %p299 = por %p297, %p298
      %p300 = scmp.ne.s32.totalorder %s292, %s294
      %p301 = scmp.eq.s32.totalorder %s32, 5
      %p302 = por %p300, %p301
      %p303 = scmp.ne.s32.totalorder %s294, %s295
      %p304 = scmp.eq.s32.totalorder %s32, 0
      %p305 = por %p303, %p304
      %p306 = scmp.ne.s32.totalorder %s294, %s295
      %p307 = scmp.eq.s32.totalorder %s33, 5
      %p308 = por %p306, %p307
      %p310 = scmp.ne.s32.totalorder %s295, %s309
      %p311 = scmp.eq.s32.totalorder %s33, 0
      %p312 = por %p310, %p311
      %p313 = scmp.le.s32.totalorder 1, %s27
      %p314 = scmp.lt.s32.totalorder %s27, 7
      %p315 = pnand %p313, %p314
      %p316 = pneg %p315
      // Predicated region
      $region9: #{tpu_custom_call.1} parent=5 // pred_check
        _
      $region10: #{tpu_custom_call.1} parent=5 // pred_check_branch
        %318 = sbr.rel (%p315) target = $region12
      $region11: #{tpu_custom_call.1} parent=5 // pred_region
        %s319 = ssub.s32 %s27, 1
        // Predicated region
        $region13: #{tpu_custom_call.1} parent=11 // pred_check
          %p320 = pneg %p48
        $region14: #{tpu_custom_call.1} parent=11 // pred_check_branch
          %322 = sbr.rel (%p320) target = $region16
        $region15: #{tpu_custom_call.1} parent=11 // pred_region
          _
        $region16: #{tpu_custom_call.1} parent=11 // pred_fallthru
          _
        // Predicated region
        $region17: #{tpu_custom_call.1} parent=11 // pred_check
          %p323 = pneg %p69
        $region18: #{tpu_custom_call.1} parent=11 // pred_check_branch
          %325 = sbr.rel (%p323) target = $region20
        $region19: #{tpu_custom_call.1} parent=11 // pred_region
          %327 = vsyncadd [#allocation4], 0
          %s328 = sshll.u32 %s1, 4
          %s329 = int_to_ptr.hbm [resolvable:$true] %s328
          %s330 = sshll.u32 [#allocation3], 4
          %s331 = int_to_ptr.vmem [resolvable:$true] %s330
          %336 = dma.hbm_to_vmem [thread:$0]  %s329, 256, %s331, [#allocation4], 128, 128, 8
        $region20: #{tpu_custom_call.1} parent=11 // pred_fallthru
          _
        // Predicated region
        $region21: #{tpu_custom_call.1} parent=11 // pred_check
          %p337 = pneg %p90
        $region22: #{tpu_custom_call.1} parent=11 // pred_check_branch
          %339 = sbr.rel (%p337) target = $region24
        $region23: #{tpu_custom_call.1} parent=11 // pred_region
          %341 = vsyncadd [#allocation7], 0
          %s342 = sshll.u32 %s2, 4
          %s343 = int_to_ptr.hbm [resolvable:$true] %s342
          %s344 = sshll.u32 [#allocation6], 4
          %s345 = int_to_ptr.vmem [resolvable:$true] %s344
          %350 = dma.hbm_to_vmem [thread:$0]  %s343, 256, %s345, [#allocation7], 128, 128, 8
        $region24: #{tpu_custom_call.1} parent=11 // pred_fallthru
          _
        // Predicated region
        $region25: #{tpu_custom_call.1} parent=11 // pred_check
          %p351 = pneg %p111
        $region26: #{tpu_custom_call.1} parent=11 // pred_check_branch
          %353 = sbr.rel (%p351) target = $region28
        $region27: #{tpu_custom_call.1} parent=11 // pred_region
          %355 = vsyncadd [#allocation7], 0
          %s356 = sshll.u32 %s3, 4
          %s357 = int_to_ptr.hbm [resolvable:$true] %s356
          %s358 = sshll.u32 [#allocation8], 4
          %s359 = int_to_ptr.vmem [resolvable:$true] %s358
          %364 = dma.hbm_to_vmem [thread:$0]  %s357, 128, %s359, [#allocation7], 64, 64, 4
        $region28: #{tpu_custom_call.1} parent=11 // pred_fallthru
          _
        // Predicated region
        $region29: #{tpu_custom_call.1} parent=11 // pred_check
          %p365 = pneg %p132
        $region30: #{tpu_custom_call.1} parent=11 // pred_check_branch
          %367 = sbr.rel (%p365) target = $region32
        $region31: #{tpu_custom_call.1} parent=11 // pred_region
          %369 = vsyncadd [#allocation10], 0
          %s370 = sshll.u32 %s4, 4
          %s371 = int_to_ptr.hbm [resolvable:$true] %s370
          %s372 = sshll.u32 [#allocation9], 4
          %s373 = int_to_ptr.vmem [resolvable:$true] %s372
          %378 = dma.hbm_to_vmem [thread:$0]  %s371, 512, %s373, [#allocation10], 64, 64, 4
        $region32: #{tpu_custom_call.1} parent=11 // pred_fallthru
          _
        // Predicated region
        $region33: #{tpu_custom_call.1} parent=11 // pred_check
          %p379 = pneg %p153
        $region34: #{tpu_custom_call.1} parent=11 // pred_check_branch
          %381 = sbr.rel (%p379) target = $region36
        $region35: #{tpu_custom_call.1} parent=11 // pred_region
          %383 = vsyncadd [#allocation10], 0
          %s384 = sshll.u32 %s5, 4
          %s385 = int_to_ptr.hbm [resolvable:$true] %s384
          %s386 = sshll.u32 [#allocation11], 4
          %s387 = int_to_ptr.vmem [resolvable:$true] %s386
          %392 = dma.hbm_to_vmem [thread:$0]  %s385, 512, %s387, [#allocation10], 64, 64, 4
        $region36: #{tpu_custom_call.1} parent=11 // pred_fallthru
          _
        // Predicated region
        $region37: #{tpu_custom_call.1} parent=11 // pred_check
          %p393 = pneg %p174
        $region38: #{tpu_custom_call.1} parent=11 // pred_check_branch
          %395 = sbr.rel (%p393) target = $region40
        $region39: #{tpu_custom_call.1} parent=11 // pred_region
          %397 = vsyncadd [#allocation13], 0
          %s399 = sshll.u32 %s6, 4
          %s400 = int_to_ptr.hbm [resolvable:$true] %s399
          %s401 = sshll.u32 [#allocation12], 4
          %s402 = int_to_ptr.vmem [resolvable:$true] %s401
          %404 = dma.hbm_to_vmem [thread:$0]  %s400, 16, %s402, [#allocation13]
        $region40: #{tpu_custom_call.1} parent=11 // pred_fallthru
          _
        // Predicated region
        $region41: #{tpu_custom_call.1} parent=11 // pred_check
          %p405 = pneg %p195
        $region42: #{tpu_custom_call.1} parent=11 // pred_check_branch
          %407 = sbr.rel (%p405) target = $region44
        $region43: #{tpu_custom_call.1} parent=11 // pred_region
          %409 = vsyncadd [#allocation13], 0
          %s411 = sshll.u32 %s7, 4
          %s412 = int_to_ptr.hbm [resolvable:$true] %s411
          %s413 = sshll.u32 [#allocation14], 4
          %s414 = int_to_ptr.vmem [resolvable:$true] %s413
          %416 = dma.hbm_to_vmem [thread:$0]  %s412, 16, %s414, [#allocation13]
        $region44: #{tpu_custom_call.1} parent=11 // pred_fallthru
          _
        // Predicated region
        $region45: #{tpu_custom_call.1} parent=11 // pred_check
          %p417 = pneg %p216
        $region46: #{tpu_custom_call.1} parent=11 // pred_check_branch
          %419 = sbr.rel (%p417) target = $region48
        $region47: #{tpu_custom_call.1} parent=11 // pred_region
          _
        $region48: #{tpu_custom_call.1} parent=11 // pred_fallthru
          _
        // Predicated region
        $region49: #{tpu_custom_call.1} parent=11 // pred_check
          %p420 = pneg %p237
        $region50: #{tpu_custom_call.1} parent=11 // pred_check_branch
          %422 = sbr.rel (%p420) target = $region52
        $region51: #{tpu_custom_call.1} parent=11 // pred_region
          _
        $region52: #{tpu_custom_call.1} parent=11 // pred_fallthru
          _
      $region12: #{tpu_custom_call.1} parent=5 // pred_fallthru
        _
      %p423 = scmp.lt.s32.totalorder %s27, 6
      // Predicated region
      $region53: #{tpu_custom_call.1} parent=5 // pred_check
        %p424 = pneg %p423
      $region54: #{tpu_custom_call.1} parent=5 // pred_check_branch
        %426 = sbr.rel (%p424) target = $region56
      $region55: #{tpu_custom_call.1} parent=5 // pred_region
        _
      $region56: #{tpu_custom_call.1} parent=5 // pred_fallthru
        _
      %p427 = scmp.le.s32.totalorder 1, %s27
      %p428 = scmp.lt.s32.totalorder %s27, 7
      %p429 = pnand %p427, %p428
      %p430 = pneg %p429
      // Predicated region
      $region57: #{tpu_custom_call.1} parent=5 // pred_check
        _
      $region58: #{tpu_custom_call.1} parent=5 // pred_check_branch
        %432 = sbr.rel (%p429) target = $region60
      $region59: #{tpu_custom_call.1} parent=5 // pred_region
        %s433 = ssub.s32 %s27, 1
        // Predicated region
        $region61: #{tpu_custom_call.1} parent=59 // pred_check
          %p434 = pneg %p69
        $region62: #{tpu_custom_call.1} parent=59 // pred_check_branch
          %436 = sbr.rel (%p434) target = $region64
        $region63: #{tpu_custom_call.1} parent=59 // pred_region
          %438 = dma.done [#allocation4], 256
        $region64: #{tpu_custom_call.1} parent=59 // pred_fallthru
          _
        // Predicated region
        $region65: #{tpu_custom_call.1} parent=59 // pred_check
          %p439 = pneg %p90
        $region66: #{tpu_custom_call.1} parent=59 // pred_check_branch
          %441 = sbr.rel (%p439) target = $region68
        $region67: #{tpu_custom_call.1} parent=59 // pred_region
          %443 = dma.done [#allocation7], 256
        $region68: #{tpu_custom_call.1} parent=59 // pred_fallthru
          _
        // Predicated region
        $region69: #{tpu_custom_call.1} parent=59 // pred_check
          %p444 = pneg %p111
        $region70: #{tpu_custom_call.1} parent=59 // pred_check_branch
          %446 = sbr.rel (%p444) target = $region72
        $region71: #{tpu_custom_call.1} parent=59 // pred_region
          %448 = dma.done [#allocation7], 128
        $region72: #{tpu_custom_call.1} parent=59 // pred_fallthru
          _
        // Predicated region
        $region73: #{tpu_custom_call.1} parent=59 // pred_check
          %p449 = pneg %p132
        $region74: #{tpu_custom_call.1} parent=59 // pred_check_branch
          %451 = sbr.rel (%p449) target = $region76
        $region75: #{tpu_custom_call.1} parent=59 // pred_region
          %453 = dma.done [#allocation10], 512
        $region76: #{tpu_custom_call.1} parent=59 // pred_fallthru
          _
        // Predicated region
        $region77: #{tpu_custom_call.1} parent=59 // pred_check
          %p454 = pneg %p153
        $region78: #{tpu_custom_call.1} parent=59 // pred_check_branch
          %456 = sbr.rel (%p454) target = $region80
        $region79: #{tpu_custom_call.1} parent=59 // pred_region
          %458 = dma.done [#allocation10], 512
        $region80: #{tpu_custom_call.1} parent=59 // pred_fallthru
          _
        // Predicated region
        $region81: #{tpu_custom_call.1} parent=59 // pred_check
          %p459 = pneg %p174
        $region82: #{tpu_custom_call.1} parent=59 // pred_check_branch
          %461 = sbr.rel (%p459) target = $region84
        $region83: #{tpu_custom_call.1} parent=59 // pred_region
          %463 = dma.done [#allocation13], 16
        $region84: #{tpu_custom_call.1} parent=59 // pred_fallthru
          _
        // Predicated region
        $region85: #{tpu_custom_call.1} parent=59 // pred_check
          %p464 = pneg %p195
        $region86: #{tpu_custom_call.1} parent=59 // pred_check_branch
          %466 = sbr.rel (%p464) target = $region88
        $region87: #{tpu_custom_call.1} parent=59 // pred_region
          %468 = dma.done [#allocation13], 16
        $region88: #{tpu_custom_call.1} parent=59 // pred_fallthru
          _
        %p469 = pneg %p48
        %p470 = pneg %p45
        %p471 = pneg %p69
        %p472 = pneg %p66
        %p473 = pneg %p90
        %p474 = pneg %p87
        %p475 = pneg %p111
        %p476 = pneg %p108
        %p477 = pneg %p132
        %p478 = pneg %p129
        %p479 = pneg %p153
        %p480 = pneg %p150
        %p481 = pneg %p174
        %p482 = pneg %p171
        %p483 = pneg %p195
        %p484 = pneg %p192
        %p485 = pneg %p216
        %p486 = pneg %p213
        %p487 = pneg %p237
        %p488 = pneg %p234
        %p489 = pneg %p263
        %p490 = pneg %p260
        %s491 = sand.u32 %s250, 1
        %s492 = scalar_lea.sflag [#allocation5], %s491
        %s493 = sand.u32 %s250, 1
        %s494 = smul.addr %s493, 8
        %s495 = scalar_lea.vmem [#allocation15], %s494
        %p496 = pneg %p284
        %p497 = pneg %p281
        %p498 = pneg %p305
        %p499 = pneg %p302
        %p501 = scmp.eq.s32.totalorder %s32, 0
        // Predicated region
        $region89: #{tpu_custom_call.1} parent=59 // pred_check
          %p502 = pneg %p501
        $region90: #{tpu_custom_call.1} parent=59 // pred_check_branch
          %504 = sbr.rel (%p502) target = $region92
        $region91: #{tpu_custom_call.1} parent=59 // pred_region
          %v505 = vld [vmem:[%s0] sm:$0xff]
          %vm506 = vcmask 7168
          %507 = vst.msk [vmem:[#allocation2] sm:$0xff] %vm506, %v505
          %v508 = vld [vmem:[#allocation3] sm:$0xff]
          %v509 = vld [vmem:[#allocation3 + $0x8] sm:$0xff]
          %vm510 = vcmask 261120
          %511 = vst.msk [vmem:[#allocation16] sm:$0xff] %vm510, %v508
          %512 = vst.msk [vmem:[#allocation16 + $0x8] sm:$0xff] %vm510, %v509
          %v513 = vld [vmem:[#allocation6] sm:$0xff]
          %v514 = vld [vmem:[#allocation6 + $0x8] sm:$0xff]
          %515 = vst.msk [vmem:[#allocation18] sm:$0xff] %vm510, %v513
          %516 = vst.msk [vmem:[#allocation18 + $0x8] sm:$0xff] %vm510, %v514
        $region92: #{tpu_custom_call.1} parent=59 // pred_fallthru
          _
        %v517 = vld [vmem:[#allocation2] sm:$0xff]
        %v518 = vlaneseq
        %v519 = vand.u32 %v518, 127
        %520 = vset.pattern.permute.xlu0 0
        %521 = vperm.xlu0 %520, %v517
        %v522 = vpop.permute.xlu0 %521
        %vm523 = vcmp.eq.s32.totalorder %v522, %v519
        %v524 = vsel %vm523, 1.0, 0.0
        %v525 = vpack.c.bf16 %v524, %v524
        %v526 = vld [vmem:[#allocation8] sm:$0xf]
        %v527 = vld [vmem:[#allocation8 + $0x4] sm:$0xf]
        %v530 = vunpack.c.l.b16 %v526
        %v531 = vunpack.c.l.b16 %v527
        %v532 = vpack.c.b16 %v531, %v530
        %vm534 = vcmask 130048
        %v536 = vsel %vm534, %v525, 0
        %538 = vmatpush.bf16.msra.mxu0 0
        %539 = vmatpush.bf16.msra.mxu0 0
        %540 = vmatpush.bf16.msra.mxu0 0
        %541 = vmatpush.bf16.msra.mxu0 0
        %542 = vmatpush.bf16.msra.mxu0 0
        %543 = vmatpush.bf16.msra.mxu0 0
        %544 = vmatpush.bf16.msra.mxu0 0
        %545 = vmatpush.bf16.msra.mxu0 %v532
        %546 = vmatmul.bf16.gmra.mxu0 %v536
        %v547 = vpop.f32.mrf.mxu0
        %v548 = vadd.f32 0.0, %v547
        %v549 = vpop.f32.mrf.mxu0
        %550 = vdwg.mxu0
        %v551 = vld [vmem:[#allocation16] sm:$0xff]
        %v552 = vld [vmem:[#allocation18] sm:$0xff]
        %554 = vrot.lane.b32.xlu0 %v551, 32
        %v555 = vpop.permute.xlu0 %554
        %vm557 = vcmask 261120
        %v558 = vsel %vm557, %v548, %v555
        %v559 = vpack.c.bf16 %v558, %v558
        %v560 = vld [vmem:[#allocation9] sm:$0xf]
        %v561 = vld [vmem:[#allocation9 + $0x4] sm:$0xf]
        %v562 = vld [vmem:[#allocation9 + $0x8] sm:$0xf]
        %v563 = vld [vmem:[#allocation9 + $0xc] sm:$0xf]
        %v564 = vld [vmem:[#allocation9 + $0x10] sm:$0xf]
        %v565 = vld [vmem:[#allocation9 + $0x14] sm:$0xf]
        %v566 = vld [vmem:[#allocation9 + $0x18] sm:$0xf]
        %v567 = vld [vmem:[#allocation9 + $0x1c] sm:$0xf]
        %v568 = vld [vmem:[#allocation12] sm:$0x1]
        %v570 = vperm.slane %v568, 0
        %v580 = vunpack.c.l.b16 %v560
        %v581 = vunpack.c.l.b16 %v561
        %v582 = vunpack.c.l.b16 %v562
        %v583 = vunpack.c.l.b16 %v563
        %v584 = vunpack.c.l.b16 %v564
        %v585 = vunpack.c.l.b16 %v565
        %v586 = vunpack.c.l.b16 %v566
        %v587 = vunpack.c.l.b16 %v567
        %v588 = vpack.c.b16 %v581, %v580
        %v589 = vpack.c.b16 %v583, %v582
        %v590 = vpack.c.b16 %v585, %v584
        %v591 = vpack.c.b16 %v587, %v586
        %vm596 = vcmask 523264
        %v598 = vsel %vm596, %v559, 0
        %600 = vmatpush.bf16.msra.mxu0 0
        %601 = vmatpush.bf16.msra.mxu0 0
        %602 = vmatpush.bf16.msra.mxu0 0
        %603 = vmatpush.bf16.msra.mxu0 0
        %604 = vmatpush.bf16.msra.mxu0 %v591
        %605 = vmatpush.bf16.msra.mxu0 %v590
        %606 = vmatpush.bf16.msra.mxu0 %v589
        %607 = vmatpush.bf16.msra.mxu0 %v588
        %608 = vmatmul.bf16.gmra.mxu0 %v598
        %v609 = vpop.f32.mrf.mxu0
        %v610 = vadd.f32 %v570, %v609
        %v611 = vpop.f32.mrf.mxu0
        %612 = vdwg.mxu0
        %v613 = vxor.u32 %v610, 2147483648
        %v614 = vmul.f32 %v613, 1.442695
        %v615 = vpow.pop %v614
        %v616 = vadd.f32 %v615, 1.0
        %v617 = vrcp.pop %v616
        %v618 = vmul.f32 %v616, %v617
        %v619 = vsub.f32 1.0, %v618
        %v620 = vmul.f32 %v617, %v619
        %v621 = vadd.f32 %v617, %v620
        %vm622 = vweird.f32 %v616
        %vm623 = vweird.f32 %v617
        %vm624 = vmor %vm622, %vm623
        %v625 = vsel %vm624, %v617, %v621
        %v626 = vand.u32 2147483647, %v616
        %vm627 = vcmp.eq.f32.partialorder %v626, 8.507059e+37
        %v628 = vand.u32 %v616, 2147483648
        %v629 = vor.u32 1.1754944e-38, %v628
        %v630 = vsel %vm627, %v629, %v625
        %v631 = vmul.f32 1.0, %v630
        %v632 = vtanh.pop %v610
        %634 = vrot.lane.b32.xlu0 %v552, 32
        %v635 = vpop.permute.xlu0 %634
        %v637 = vmul.f32 %v631, %v635
        %639 = vrot.lane.b32.xlu0 %v632, 64
        %v640 = vpop.permute.xlu0 %639
        %v642 = vmul.f32 %v631, %v640
        %644 = vrot.lane.b32.xlu0 %v642, 32
        %v645 = vpop.permute.xlu0 %644
        %v647 = vadd.f32 %v637, %v645
        %v648 = vtanh.pop %v647
        %650 = vrot.lane.b32.xlu0 %v648, 64
        %v651 = vpop.permute.xlu0 %650
        %v653 = vmul.f32 %v631, %v651
        %655 = vrot.lane.b32.xlu0 %v653, 32
        %v656 = vpop.permute.xlu0 %655
        %658 = vst.msk [vmem:[#allocation16] sm:$0xff] %vm557, %v656
        %660 = vrot.lane.b32.xlu0 %v647, 96
        %v661 = vpop.permute.xlu0 %660
        %663 = vst.msk [vmem:[#allocation18] sm:$0xff] %vm557, %v661
        %s664 = scalar_lea.vmem [#allocation16], 8
        %v665 = vld [vmem:[%s664] sm:$0xff]
        %s666 = scalar_lea.vmem [#allocation18], 8
        %v667 = vld [vmem:[%s666] sm:$0xff]
        %669 = vrot.lane.b32.xlu0 %v665, 32
        %v670 = vpop.permute.xlu0 %669
        %v672 = vsel %vm557, %v656, %v670
        %v673 = vpack.c.bf16 %v672, %v672
        %v674 = vld [vmem:[#allocation11] sm:$0xf]
        %v675 = vld [vmem:[#allocation11 + $0x4] sm:$0xf]
        %v676 = vld [vmem:[#allocation11 + $0x8] sm:$0xf]
        %v677 = vld [vmem:[#allocation11 + $0xc] sm:$0xf]
        %v678 = vld [vmem:[#allocation11 + $0x10] sm:$0xf]
        %v679 = vld [vmem:[#allocation11 + $0x14] sm:$0xf]
        %v680 = vld [vmem:[#allocation11 + $0x18] sm:$0xf]
        %v681 = vld [vmem:[#allocation11 + $0x1c] sm:$0xf]
        %v682 = vld [vmem:[#allocation14] sm:$0x1]
        %v684 = vperm.slane %v682, 0
        %v694 = vunpack.c.l.b16 %v674
        %v695 = vunpack.c.l.b16 %v675
        %v696 = vunpack.c.l.b16 %v676
        %v697 = vunpack.c.l.b16 %v677
        %v698 = vunpack.c.l.b16 %v678
        %v699 = vunpack.c.l.b16 %v679
        %v700 = vunpack.c.l.b16 %v680
        %v701 = vunpack.c.l.b16 %v681
        %v702 = vpack.c.b16 %v695, %v694
        %v703 = vpack.c.b16 %v697, %v696
        %v704 = vpack.c.b16 %v699, %v698
        %v705 = vpack.c.b16 %v701, %v700
        %v711 = vsel %vm596, %v673, 0
        %713 = vmatpush.bf16.msra.mxu0 0
        %714 = vmatpush.bf16.msra.mxu0 0
        %715 = vmatpush.bf16.msra.mxu0 0
        %716 = vmatpush.bf16.msra.mxu0 0
        %717 = vmatpush.bf16.msra.mxu0 %v705
        %718 = vmatpush.bf16.msra.mxu0 %v704
        %719 = vmatpush.bf16.msra.mxu0 %v703
        %720 = vmatpush.bf16.msra.mxu0 %v702
        %721 = vmatmul.bf16.gmra.mxu0 %v711
        %v722 = vpop.f32.mrf.mxu0
        %v723 = vadd.f32 %v684, %v722
        %v724 = vpop.f32.mrf.mxu0
        %725 = vdwg.mxu0
        %v726 = vxor.u32 %v723, 2147483648
        %v727 = vmul.f32 %v726, 1.442695
        %v728 = vpow.pop %v727
        %v729 = vadd.f32 %v728, 1.0
        %v730 = vrcp.pop %v729
        %v731 = vmul.f32 %v729, %v730
        %v732 = vsub.f32 1.0, %v731
        %v733 = vmul.f32 %v730, %v732
        %v734 = vadd.f32 %v730, %v733
        %vm735 = vweird.f32 %v729
        %vm736 = vweird.f32 %v730
        %vm737 = vmor %vm735, %vm736
        %v738 = vsel %vm737, %v730, %v734
        %v739 = vand.u32 2147483647, %v729
        %vm740 = vcmp.eq.f32.partialorder %v739, 8.507059e+37
        %v741 = vand.u32 %v729, 2147483648
        %v742 = vor.u32 1.1754944e-38, %v741
        %v743 = vsel %vm740, %v742, %v738
        %v744 = vmul.f32 1.0, %v743
        %v745 = vtanh.pop %v723
        %747 = vrot.lane.b32.xlu0 %v667, 32
        %v748 = vpop.permute.xlu0 %747
        %v750 = vmul.f32 %v744, %v748
        %752 = vrot.lane.b32.xlu0 %v745, 64
        %v753 = vpop.permute.xlu0 %752
        %v755 = vmul.f32 %v744, %v753
        %757 = vrot.lane.b32.xlu0 %v755, 32
        %v758 = vpop.permute.xlu0 %757
        %v760 = vadd.f32 %v750, %v758
        %v761 = vtanh.pop %v760
        %763 = vrot.lane.b32.xlu0 %v761, 64
        %v764 = vpop.permute.xlu0 %763
        %v766 = vmul.f32 %v744, %v764
        %768 = vrot.lane.b32.xlu0 %v766, 32
        %v769 = vpop.permute.xlu0 %768
        %771 = vst.msk [vmem:[%s664] sm:$0xff] %vm557, %v769
        %773 = vrot.lane.b32.xlu0 %v760, 96
        %v774 = vpop.permute.xlu0 %773
        %776 = vst.msk [vmem:[%s666] sm:$0xff] %vm557, %v774
        %v777 = vpack.c.bf16 %v766, %v766
        %v778 = vld [vmem:[%s8] sm:$0xf]
        %v779 = vld [vmem:[%s8 + $0x4] sm:$0xf]
        %v780 = vld [vmem:[%s8 + $0x8] sm:$0xf]
        %v781 = vld [vmem:[%s8 + $0xc] sm:$0xf]
        %v782 = vld [vmem:[%s9] sm:$0x1]
        %v784 = vperm.slane %v782, 0
        %787 = vrot.lane.b32.xlu0 %v777, 32
        %v788 = vpop.permute.xlu0 %787
        %v793 = vunpack.c.l.b16 %v778
        %v794 = vunpack.c.l.b16 %v779
        %v795 = vunpack.c.l.b16 %v780
        %v796 = vunpack.c.l.b16 %v781
        %v797 = vpack.c.b16 %v794, %v793
        %v798 = vpack.c.b16 %v796, %v795
        %v802 = vsel %vm557, %v788, 0
        %804 = vmatpush.bf16.msra.mxu0 0
        %805 = vmatpush.bf16.msra.mxu0 0
        %806 = vmatpush.bf16.msra.mxu0 0
        %807 = vmatpush.bf16.msra.mxu0 0
        %808 = vmatpush.bf16.msra.mxu0 0
        %809 = vmatpush.bf16.msra.mxu0 0
        %810 = vmatpush.bf16.msra.mxu0 %v798
        %811 = vmatpush.bf16.msra.mxu0 %v797
        %812 = vmatmul.bf16.gmra.mxu0 %v802
        %v813 = vpop.f32.mrf.mxu0
        %v814 = vadd.f32 %v784, %v813
        %v815 = vpop.f32.mrf.mxu0
        %816 = vdwg.mxu0
        %817 = vst [vmem:[%s495] sm:$0xff] %v814
        %818 = vmax.xlane.f32.xlu0 %v814
        %v819 = vpop.xlane.xlu0 %818
        %vm820 = vcmp.eq.f32.partialorder %v814, %v819
        %v821 = vsel %vm820, %v519, 128
        %v822 = vand.u32 %v821, 65535
        %v823 = vshra.s32 %v821, 16
        %v824 = vcvt.s32.f32 %v822
        %v825 = vcvt.s32.f32 %v823
        %826 = vmin.xlane.f32.xlu0 %v825
        %v827 = vpop.xlane.xlu0 %826
        %vm828 = vcmp.eq.f32.partialorder %v825, %v827
        %v829 = vsel %vm828, %v824, inf
        %830 = vmin.xlane.f32.xlu0 %v829
        %v831 = vpop.xlane.xlu0 %830
        %v832 = vcvt.f32.s32 %v831
        %v833 = vcvt.f32.s32 %v827
        %v834 = vshll.u32 %v833, 16
        %v835 = vadd.s32 %v834, %v832
        %vm836 = vcmask 7168
        %837 = vst.msk [vmem:[#allocation2] sm:$0xff] %vm836, %v835
        %s838 = sand.u32 %s250, 1
        %s839 = scalar_lea.sflag [#allocation5], %s838
        %s840 = sand.u32 %s250, 1
        %s841 = smul.addr %s840, 8
        %s842 = scalar_lea.vmem [#allocation15], %s841
        // Predicated region
        $region93: #{tpu_custom_call.1} parent=59 // pred_check
          %p843 = pneg %p260
        $region94: #{tpu_custom_call.1} parent=59 // pred_check_branch
          %845 = sbr.rel (%p843) target = $region96
        $region95: #{tpu_custom_call.1} parent=59 // pred_region
          %847 = vsyncadd %s839, 0
          %s848 = smul.addr %s32, 8
          %s849 = scalar_lea.hbm %s10, %s848
          %s851 = sshll.u32 %s842, 4
          %s852 = int_to_ptr.vmem [resolvable:$true] %s851
          %s853 = sshll.u32 %s849, 4
          %s854 = int_to_ptr.hbm [resolvable:$true] %s853
          %856 = dma.vmem_to_hbm [thread:$0]  %s852, 128, %s854, %s839
        $region96: #{tpu_custom_call.1} parent=59 // pred_fallthru
          _
        // Predicated region
        $region97: #{tpu_custom_call.1} parent=59 // pred_check
          %p857 = pneg %p281
        $region98: #{tpu_custom_call.1} parent=59 // pred_check_branch
          %859 = sbr.rel (%p857) target = $region100
        $region99: #{tpu_custom_call.1} parent=59 // pred_region
          %861 = vsyncadd [#allocation17], 0
          %s862 = sshll.u32 [#allocation16], 4
          %s863 = int_to_ptr.vmem [resolvable:$true] %s862
          %s864 = sshll.u32 %s11, 4
          %s865 = int_to_ptr.hbm [resolvable:$true] %s864
          %870 = dma.vmem_to_hbm [thread:$0]  %s863, 256, %s865, [#allocation17], 128, 128, 8
        $region100: #{tpu_custom_call.1} parent=59 // pred_fallthru
          _
        // Predicated region
        $region101: #{tpu_custom_call.1} parent=59 // pred_check
          %p871 = pneg %p302
        $region102: #{tpu_custom_call.1} parent=59 // pred_check_branch
          %873 = sbr.rel (%p871) target = $region104
        $region103: #{tpu_custom_call.1} parent=59 // pred_region
          %875 = vsyncadd [#allocation17], 0
          %s876 = sshll.u32 [#allocation18], 4
          %s877 = int_to_ptr.vmem [resolvable:$true] %s876
          %s878 = sshll.u32 %s12, 4
          %s879 = int_to_ptr.hbm [resolvable:$true] %s878
          %884 = dma.vmem_to_hbm [thread:$0]  %s877, 256, %s879, [#allocation17], 128, 128, 8
        $region104: #{tpu_custom_call.1} parent=59 // pred_fallthru
          _
        // Predicated region
        $region105: #{tpu_custom_call.1} parent=59 // pred_check
          %p885 = pneg %p281
        $region106: #{tpu_custom_call.1} parent=59 // pred_check_branch
          %887 = sbr.rel (%p885) target = $region108
        $region107: #{tpu_custom_call.1} parent=59 // pred_region
          %889 = dma.done [#allocation17], 256
        $region108: #{tpu_custom_call.1} parent=59 // pred_fallthru
          _
        // Predicated region
        $region109: #{tpu_custom_call.1} parent=59 // pred_check
          %p890 = pneg %p302
        $region110: #{tpu_custom_call.1} parent=59 // pred_check_branch
          %892 = sbr.rel (%p890) target = $region112
        $region111: #{tpu_custom_call.1} parent=59 // pred_region
          %894 = dma.done [#allocation17], 256
        $region112: #{tpu_custom_call.1} parent=59 // pred_fallthru
          _
      $region60: #{tpu_custom_call.1} parent=5 // pred_fallthru
        _
      %p895 = scmp.le.s32.totalorder 2, %s27
      // Predicated region
      $region113: #{tpu_custom_call.1} parent=5 // pred_check
        %p896 = pneg %p895
      $region114: #{tpu_custom_call.1} parent=5 // pred_check_branch
        %898 = sbr.rel (%p896) target = $region116
      $region115: #{tpu_custom_call.1} parent=5 // pred_region
        %s899 = ssub.s32 %s27, 2
        // Predicated region
        $region117: #{tpu_custom_call.1} parent=115 // pred_check
          %p900 = pneg %p266
        $region118: #{tpu_custom_call.1} parent=115 // pred_check_branch
          %902 = sbr.rel (%p900) target = $region120
        $region119: #{tpu_custom_call.1} parent=115 // pred_region
          %s903 = sand.u32 %s251, 1
          %s904 = scalar_lea.sflag [#allocation5], %s903
          %s905 = sand.u32 %s251, 1
          %s906 = smul.addr %s905, 8
          %s907 = scalar_lea.vmem [#allocation15], %s906
          %909 = dma.done %s904, 128
        $region120: #{tpu_custom_call.1} parent=115 // pred_fallthru
          _
      $region116: #{tpu_custom_call.1} parent=5 // pred_fallthru
        _
    $region6: #{tpu_custom_call.1} parent=1 // loop_footer
      %s31 = sadd.s32 1, %s27
    $region7: #{tpu_custom_call.1} parent=1 // loop_footer_branch
      %26 = sbr.rel target = $region3
    $region8: #{tpu_custom_call.1} parent=1 // loop_exit
      _
    %910 = vsyncpa [#allocation4], 1
    %s911 = scalar_lea.sflag [#allocation4], 1
    %912 = vsyncpa %s911, 1
    %913 = vsyncpa [#allocation7], 1
    %914 = vsyncpa [#allocation10], 1
    %915 = vsyncpa [#allocation13], 1
    %916 = vsyncpa [#allocation5], 1
    %s917 = scalar_lea.sflag [#allocation5], 1
    %918 = vsyncpa %s917, 1
    %919 = vsyncpa [#allocation17], 1

</llo_original>
